<compile_context>
chip_gen: v7x
topology: tpu7x:2x2x1
jax: 0.10.0
libtpu: 0.0.40
codegen_flags: <defaults>
</compile_context>

<pallas_src>
import jax
import jax.numpy as jnp
from jax.experimental import pallas as pl
from jax.experimental.pallas import tpu as pltpu


def _pwconv_kernel(x_ref, w_ref, b_ref, o_ref, acc_ref):
    # x_ref: (tk, ts)   Cin tile x spatial tile (spatial = lanes)
    # w_ref: (tn, tk)   Cout tile x Cin tile
    # b_ref: (tn, 1)
    # o_ref: (tn, ts)
    # acc_ref: (tn, ts) f32 accumulator, resident across the Cin grid axis
    k = pl.program_id(3)

    @pl.when(k == 0)
    def _():
        acc_ref[...] = jnp.zeros_like(acc_ref)

    acc_ref[...] += jnp.dot(w_ref[...], x_ref[...],
                            preferred_element_type=jnp.float32)

    @pl.when(k == pl.num_programs(3) - 1)
    def _():
        o_ref[...] = (acc_ref[...] + b_ref[...]).astype(o_ref.dtype)


def _pick_channel_tiles(c_in, c_out):
    # Cin is the weight's lane dim -> a tiled Cin must be a multiple of 128.
    tk = c_in
    if c_in > 512 and c_in % 128 == 0:
        for cand in (512, 256, 128):
            if c_in % cand == 0:
                tk = cand
                break
    # Cout is a sublane dim -> a tiled Cout must be a multiple of 8.
    tn = c_out
    if c_out > 1024 and c_out % 8 == 0:
        for cand in (1024, 512, 256, 128, 64, 32, 16, 8):
            if c_out % cand == 0:
                tn = cand
                break
    return tk, tn


def _pick_spatial_tile(hw, max_tile):
    """Returns (tile, padded_hw).  Prefers an exact multiple-of-128 divisor."""
    if hw <= max_tile:
        return hw, hw                      # single full-width tile, no padding
    t = (max_tile // 128) * 128
    while t >= 128:
        if hw % t == 0:
            return t, hw                   # exact divisor, no padding
        t -= 128
    ts = (max_tile // 128) * 128
    return ts, pl.cdiv(hw, ts) * ts        # rare: needs one pad copy


def pointwise_conv(x_nchw, weight, bias, *, max_spatial_tile=2048,
                   vmem_budget_bytes=40 * 1024 * 1024):
    """1x1 conv. x_nchw: (N, C, H, W); weight: (Cout, Cin, 1, 1); bias: (Cout,)."""
    n, c_in, h, w = x_nchw.shape
    c_out = weight.shape[0]
    hw = h * w
    itemsize = jnp.dtype(x_nchw.dtype).itemsize

    # Native layout: pure reshapes, no activation transposes in HBM.
    x3 = x_nchw.reshape(n, c_in, hw)        # (N, Cin, HW)
    w2 = weight.reshape(c_out, c_in)        # (Cout, Cin) -- no transpose needed
    b2 = bias.reshape(c_out, 1)             # broadcast over the spatial lanes

    tk, tn = _pick_channel_tiles(c_in, c_out)
    ts, hw_pad = _pick_spatial_tile(hw, max_spatial_tile)

    def vmem_bytes(ts_):
        return (2 * tk * ts_ * itemsize     # x tile (double-buffered)
                + 2 * tn * tk * itemsize    # weight tile
                + 2 * tn * itemsize         # bias tile
                + 2 * tn * ts_ * itemsize   # out tile
                + tn * ts_ * 4)             # f32 accumulator scratch

    # Shrink the spatial tile if the per-step working set would not fit the
    # VMEM budget (keeps ts a multiple of 128 and a divisor of hw_pad).
    while (vmem_bytes(ts) > vmem_budget_bytes and ts > 128
           and ts % 256 == 0 and hw_pad % (ts // 2) == 0):
        ts //= 2

    if hw_pad != hw:
        # TODO(synk): only hit when H*W > one tile and not a multiple of 128;
        # costs one extra copy of the activation.
        x3 = jnp.pad(x3, ((0, 0), (0, 0), (0, hw_pad - hw)))

    grid = (n, hw_pad // ts, c_out // tn, c_in // tk)

    # NOTE: for very large channel counts on v6e/v7x a bf16 cast of x/w (with
    # f32 accumulation) would raise MXU throughput; skipped here to keep f32
    # numerics in the mem-bound small-channel regime.
    out3 = pl.pallas_call(
        _pwconv_kernel,
        out_shape=jax.ShapeDtypeStruct((n, c_out, hw_pad), x_nchw.dtype),
        grid_spec=pltpu.PrefetchScalarGridSpec(
            num_scalar_prefetch=0,
            grid=grid,
            in_specs=[
                # x: (N, Cin, HW) -> (tk, ts), batch dim squeezed; lanes = spatial.
                pl.BlockSpec((None, tk, ts), lambda b, s, j, k: (b, k, s)),
                # weight: (Cout, Cin) -> (tn, tk); grid-invariant over b, s.
                pl.BlockSpec((tn, tk), lambda b, s, j, k: (j, k)),
                # bias: (Cout, 1) -> (tn, 1)
                pl.BlockSpec((tn, 1), lambda b, s, j, k: (j, 0)),
            ],
            out_specs=pl.BlockSpec((None, tn, ts), lambda b, s, j, k: (b, j, s)),
            scratch_shapes=[pltpu.VMEM((tn, ts), jnp.float32)],
        ),
        compiler_params=pltpu.CompilerParams(
            # batch / spatial / Cout shard across cores (v7x megacore);
            # Cin is the accumulated reduction, kept last.
            dimension_semantics=("parallel", "parallel", "parallel", "arbitrary"),
            # Explicit scoped-VMEM limit so big tiles double-buffer on v6e while
            # staying safely under v7x's 64 MiB physical VMEM.
            vmem_limit_bytes=int(min(48 * 1024 * 1024,
                                     max(vmem_bytes(ts) + (4 << 20), 16 << 20))),
        ),
    )(x3, w2, b2)

    if hw_pad != hw:
        out3 = out3[:, :, :hw]
    return out3.reshape(n, c_out, h, w)


def _init_params(key, in_channels):
    """Deterministic init mirroring nn.Conv2d default (kaiming-uniform style)."""
    k_w, k_b = jax.random.split(key)
    fan_in = in_channels * 1 * 1
    bound = 1.0 / (fan_in ** 0.5)
    weight = jax.random.uniform(
        k_w, (in_channels, in_channels, 1, 1), jnp.float32, -bound, bound)
    bias = jax.random.uniform(
        k_b, (in_channels,), jnp.float32, -bound, bound)
    return weight, bias


if __name__ == "__main__":
    key = jax.random.PRNGKey(0)
    k_x, k_p = jax.random.split(key)

    N, C, H, W = 2, 4, 16, 16
    x = jax.random.normal(k_x, (N, C, H, W), jnp.float32)
    weight, bias = _init_params(k_p, C)

    out = pointwise_conv(x, weight, bias)
    out = jax.block_until_ready(out)

    # Reference check in plain JAX (1x1 conv == einsum over channel dim).
    ref = jnp.einsum("nchw,oc->nohw", x, weight.reshape(C, C)) + bias[None, :, None, None]
    assert out.shape == (N, C, H, W)
    assert jnp.allclose(out, ref, atol=1e-5, rtol=1e-5)

    print("KERNEL_OK")
</pallas_src>

<mosaic_0001>
module attributes {stable_mosaic.version = 11 : i64} {
  func.func @_pwconv_kernel(%arg0: i32, %arg1: i32, %arg2: i32, %arg3: i32, %arg4: memref<1x4x256xf32, #tpu.memory_space<vmem>>, %arg5: memref<4x4xf32, #tpu.memory_space<vmem>>, %arg6: memref<4x1xf32, #tpu.memory_space<vmem>>, %arg7: memref<1x4x256xf32, #tpu.memory_space<vmem>>, %arg8: memref<4x256xf32, #tpu.memory_space<vmem>>) attributes {dimension_semantics = [#tpu.dimension_semantics<parallel>, #tpu.dimension_semantics<parallel>, #tpu.dimension_semantics<parallel>, #tpu.dimension_semantics<arbitrary>], iteration_bounds = array<i64: 2, 1, 1, 1>, scalar_prefetch = 0 : i64, scratch_operands = 1 : i64, tpu.core_type = #tpu.core_type<tc>, window_params = [{transform_indices = @transform_0, window_bounds = array<i64: 1, 4, 256>}, {transform_indices = @transform_1, window_bounds = array<i64: 4, 4>}, {transform_indices = @transform_2, window_bounds = array<i64: 4, 1>}, {transform_indices = @transform_3, window_bounds = array<i64: 1, 4, 256>}]} {
    %c0_i32 = arith.constant 0 : i32
    %0 = arith.cmpi eq, %arg3, %c0_i32 : i32
    %1 = arith.extui %0 : i1 to i32
    %c0_i32_0 = arith.constant 0 : i32
    %2 = arith.cmpi ne, %1, %c0_i32_0 : i32
    scf.if %2 {
      %cst_11 = arith.constant 0.000000e+00 : f32
      %13 = vector.broadcast %cst_11 : f32 to vector<4x256xf32>
      %c0_12 = arith.constant 0 : index
      %c0_13 = arith.constant 0 : index
      %14 = vector.load %arg8[%c0_12, %c0_13] : memref<4x256xf32, #tpu.memory_space<vmem>>, vector<4x256xf32>
      tpu.vector_store %arg8[%c0_12, %c0_13], %13 {strides = array<i32>} : memref<4x256xf32, #tpu.memory_space<vmem>>, vector<4x256xf32>,
    } else {
    }
    %c0 = arith.constant 0 : index
    %c0_1 = arith.constant 0 : index
    %3 = vector.load %arg8[%c0, %c0_1] : memref<4x256xf32, #tpu.memory_space<vmem>>, vector<4x256xf32>
    %c0_2 = arith.constant 0 : index
    %c0_3 = arith.constant 0 : index
    %4 = vector.load %arg5[%c0_2, %c0_3] : memref<4x4xf32, #tpu.memory_space<vmem>>, vector<4x4xf32>
    %c0_4 = arith.constant 0 : index
    %c0_5 = arith.constant 0 : index
    %c0_6 = arith.constant 0 : index
    %5 = vector.load %arg4[%c0_4, %c0_5, %c0_6] : memref<1x4x256xf32, #tpu.memory_space<vmem>>, vector<1x4x256xf32>
    %6 = vector.shape_cast %5 : vector<1x4x256xf32> to vector<4x256xf32>
    %cst = arith.constant dense<0.000000e+00> : vector<4x256xf32>
    %7 = tpu.matmul %4, %6, %cst {dimension_numbers = #tpu.dot_dimension_numbers<[1], [0], [0], [1], [0, 0, 1, 1], [], []>} : vector<4x4xf32>, vector<4x256xf32>, vector<4x256xf32> -> vector<4x256xf32>
    %8 = arith.addf %3, %7 : vector<4x256xf32>
    %c0_7 = arith.constant 0 : index
    %c0_8 = arith.constant 0 : index
    %9 = vector.load %arg8[%c0_7, %c0_8] : memref<4x256xf32, #tpu.memory_space<vmem>>, vector<4x256xf32>
    tpu.vector_store %arg8[%c0_7, %c0_8], %8 {strides = array<i32>} : memref<4x256xf32, #tpu.memory_space<vmem>>, vector<4x256xf32>,
    %c0_i32_9 = arith.constant 0 : i32
    %10 = arith.cmpi eq, %arg3, %c0_i32_9 : i32
    %11 = arith.extui %10 : i1 to i32
    %c0_i32_10 = arith.constant 0 : i32
    %12 = arith.cmpi ne, %11, %c0_i32_10 : i32
    scf.if %12 {
      %c0_11 = arith.constant 0 : index
      %c0_12 = arith.constant 0 : index
      %13 = vector.load %arg8[%c0_11, %c0_12] : memref<4x256xf32, #tpu.memory_space<vmem>>, vector<4x256xf32>
      %c0_13 = arith.constant 0 : index
      %c0_14 = arith.constant 0 : index
      %14 = vector.load %arg6[%c0_13, %c0_14] : memref<4x1xf32, #tpu.memory_space<vmem>>, vector<4x1xf32>
      %15 = vector.broadcast %14 : vector<4x1xf32> to vector<4x256xf32>
      %16 = arith.addf %13, %15 : vector<4x256xf32>
      %c0_15 = arith.constant 0 : index
      %c0_16 = arith.constant 0 : index
      %c0_17 = arith.constant 0 : index
      %17 = vector.load %arg7[%c0_15, %c0_16, %c0_17] : memref<1x4x256xf32, #tpu.memory_space<vmem>>, vector<1x4x256xf32>
      %18 = vector.shape_cast %17 : vector<1x4x256xf32> to vector<4x256xf32>
      %19 = vector.shape_cast %16 : vector<4x256xf32> to vector<1x4x256xf32>
      tpu.vector_store %arg7[%c0_15, %c0_16, %c0_17], %19 {strides = array<i32>} : memref<1x4x256xf32, #tpu.memory_space<vmem>>, vector<1x4x256xf32>,
    } else {
    }
    return
  }
  func.func @transform_0(%arg0: i32, %arg1: i32, %arg2: i32, %arg3: i32) -> (i32, i32, i32) {
    %c0_i32 = arith.constant 0 : i32
    return %arg0, %arg3, %arg1 : i32, i32, i32
  }
  func.func @transform_1(%arg0: i32, %arg1: i32, %arg2: i32, %arg3: i32) -> (i32, i32) {
    %c0_i32 = arith.constant 0 : i32
    return %arg2, %arg3 : i32, i32
  }
  func.func @transform_2(%arg0: i32, %arg1: i32, %arg2: i32, %arg3: i32) -> (i32, i32) {
    %c0_i32 = arith.constant 0 : i32
    %c0_i32_0 = arith.constant 0 : i32
    return %arg2, %c0_i32 : i32, i32
  }
  func.func @transform_3(%arg0: i32, %arg1: i32, %arg2: i32, %arg3: i32) -> (i32, i32, i32) {
    %c0_i32 = arith.constant 0 : i32
    return %arg0, %arg2, %arg1 : i32, i32, i32
  }
}

</mosaic_0001>

<llo_original>
// kernel: tpu_custom_call.1
$region0: #{tpu_custom_call.1}
  #allocation0 [shape = 'u32[]', space=smem, size = 0x4, offset = 0x4, fixed_abs, tag = 'smem constant byte address 0x4 - core index']
  #allocation1 [shape = 'u32[144,128]{1,0:T(1,128)}', space=vmem, size = 0x12000, scoped, tag = 'internal scratch']
  #allocation2 [shape = 'f32[4,256]{1,0:T(4,128)}', space=vmem, size = 0x1000, scoped, tag = 'scratch operand']
  %s0 = inlined_call_operand.hbm [shape: f32[2,4,256], index: 0, kind: input, shape index: {}]
  %s1 = inlined_call_operand.vmem [shape: f32[4,4], index: 1, kind: input, shape index: {}]
  %s2 = inlined_call_operand.vmem [shape: f32[4,1], index: 2, kind: input, shape index: {}]
  %s3 = inlined_call_operand.hbm [shape: f32[2,4,256], index: 3, kind: output, shape index: {}]
  %s4 = sld [smem:[#allocation0]]
  $region57: #{tpu_custom_call.1} parent=0
    _
  %s6 = ssub.s32 1, %s4
  %s7 = scalar_select 0, %s6, %s4
  $region1: #{tpu_custom_call.1} parent=0
    #allocation3 [shape = 'u8[8192]{0}', space=vmem, size = 0x2000, scoped, tag = 'input window, operand 0']
    #allocation4 [shape = 's32[2]{0}', space=sflag, size = 0x8, scoped, tag = 'scoped memory for tpu_custom_call.1']
    #allocation5 [shape = 's32[2]{0}', space=sflag, size = 0x8, scoped, tag = 'scoped memory for tpu_custom_call.1']
    #allocation6 [shape = 'u8[8192]{0}', space=vmem, size = 0x2000, scoped, tag = 'output window, operand 0']
    %8 = vsyncpa [#allocation4], 0
    %s9 = scalar_lea.sflag [#allocation4], 1
    %10 = vsyncpa %s9, 0
    %11 = vsyncpa [#allocation5], 0
    %s12 = scalar_lea.sflag [#allocation5], 1
    %13 = vsyncpa %s12, 0
    loop: start=0, step=1, limit=4
    $region2: #{tpu_custom_call.1} parent=1 // loop_pre_header
      _
    $region3: #{tpu_custom_call.1} parent=1 // loop_header
      %s15 = sphi 0, %s19
      %p16 = scmp.ge.s32.totalorder %s15, 4
      %s22 = sphi 0, %s48
      %s23 = sphi 0, %s44
      %s24 = sphi 0, %s40
      %s25 = sphi 0, %s36
      %s26 = sphi 0, %s22
      %s27 = sphi 0, %s23
      %s28 = sphi 0, %s24
      %s29 = sphi 0, %s25
      %s30 = sphi 0, %s26
      %s31 = sphi 0, %s27
      %s32 = sphi 0, %s28
      %s33 = sphi 0, %s29
      %s55 = sphi 0, %s57
      %s58 = sphi 0, %s55
      %s59 = sphi 0, %s58
      %s75 = sphi 0, %s59
      %s83 = sphi 0, %s85
      %s86 = sphi 0, %s83
      %s87 = sphi 0, %s86
      %s103 = sphi 0, %s87
      %s109 = sphi 0, %s111
      %s112 = sphi 0, %s109
      %s113 = sphi 0, %s112
      %s129 = sphi 0, %s113
      %s139 = sphi 0, %s141
      %s142 = sphi 0, %s139
      %s143 = sphi 0, %s142
      %s159 = sphi 0, %s143
    $region4: #{tpu_custom_call.1} parent=1 // loop_header_branch
      %18 = sbr.rel (%p16) target = $region8
    $region5: #{tpu_custom_call.1} parent=1 // loop_body
      %s20 = ssub.s32 %s15, 1
      %s21 = ssub.s32 %s15, 2
      %s34 = sadd.s32 1, %s25
      %p35 = scmp.ge.s32.totalorder %s34, 1
      %s36 = scalar_select %p35, 0, %s34
      %s37 = sadd.s32 1, %s24
      %s38 = scalar_select %p35, %s37, %s24
      %p39 = scmp.ge.s32.totalorder %s38, 1
      %s40 = scalar_select %p39, 0, %s38
      %s41 = sadd.s32 1, %s23
      %s42 = scalar_select %p39, %s41, %s23
      %p43 = scmp.ge.s32.totalorder %s42, 1
      %s44 = scalar_select %p43, 0, %s42
      %s45 = sadd.s32 1, %s22
      %s46 = scalar_select %p43, %s45, %s22
      %p47 = scmp.ge.s32.totalorder %s46, 2
      %s48 = scalar_select %p47, 0, %s46
      %s49 = ssub.s32 %s22, %s48
      %s50 = ssub.s32 %s25, %s36
      %s51 = sor.u32 %s49, %s50
      %s52 = ssub.s32 %s23, %s44
      %s53 = sor.u32 %s51, %s52
      %p54 = scmp.eq.s32.totalorder %s53, 0
      %s56 = sadd.s32 %s55, 1
      %s57 = scalar_select %p54, %s55, %s56
      %p60 = pneg %p54
      %p61 = scmp.eq.s32.totalorder %s15, 1
      %p62 = por %p60, %p61
      %p63 = scmp.ne.s32.totalorder %s55, %s58
      %p64 = scmp.eq.s32.totalorder %s15, 0
      %p65 = por %p63, %p64
      %p66 = scmp.ne.s32.totalorder %s55, %s58
      %p67 = scmp.eq.s32.totalorder %s20, 1
      %p68 = por %p66, %p67
      %p69 = scmp.ne.s32.totalorder %s58, %s59
      %p70 = scmp.eq.s32.totalorder %s20, 0
      %p71 = por %p69, %p70
      %p72 = scmp.ne.s32.totalorder %s58, %s59
      %p73 = scmp.eq.s32.totalorder %s21, 1
      %p74 = por %p72, %p73
      %p76 = scmp.ne.s32.totalorder %s59, %s75
      %p77 = scmp.eq.s32.totalorder %s21, 0
      %p78 = por %p76, %p77
      %s79 = ssub.s32 %s24, %s40
      %s80 = ssub.s32 %s25, %s36
      %s81 = sor.u32 %s79, %s80
      %p82 = scmp.eq.s32.totalorder %s81, 0
      %s84 = sadd.s32 %s83, 1
      %s85 = scalar_select %p82, %s83, %s84
      %p88 = pneg %p82
      %p89 = scmp.eq.s32.totalorder %s15, 1
      %p90 = por %p88, %p89
      %p91 = scmp.ne.s32.totalorder %s83, %s86
      %p92 = scmp.eq.s32.totalorder %s15, 0
      %p93 = por %p91, %p92
      %p94 = scmp.ne.s32.totalorder %s83, %s86
      %p95 = scmp.eq.s32.totalorder %s20, 1
      %p96 = por %p94, %p95
      %p97 = scmp.ne.s32.totalorder %s86, %s87
      %p98 = scmp.eq.s32.totalorder %s20, 0
      %p99 = por %p97, %p98
      %p100 = scmp.ne.s32.totalorder %s86, %s87
      %p101 = scmp.eq.s32.totalorder %s21, 1
      %p102 = por %p100, %p101
      %p104 = scmp.ne.s32.totalorder %s87, %s103
      %p105 = scmp.eq.s32.totalorder %s21, 0
      %p106 = por %p104, %p105
      %s107 = ssub.s32 %s24, %s40
      %p108 = scmp.eq.s32.totalorder %s107, 0
      %s110 = sadd.s32 %s109, 1
      %s111 = scalar_select %p108, %s109, %s110
      %p114 = pneg %p108
      %p115 = scmp.eq.s32.totalorder %s15, 1
      %p116 = por %p114, %p115
      %p117 = scmp.ne.s32.totalorder %s109, %s112
      %p118 = scmp.eq.s32.totalorder %s15, 0
      %p119 = por %p117, %p118
      %p120 = scmp.ne.s32.totalorder %s109, %s112
      %p121 = scmp.eq.s32.totalorder %s20, 1
      %p122 = por %p120, %p121
      %p123 = scmp.ne.s32.totalorder %s112, %s113
      %p124 = scmp.eq.s32.totalorder %s20, 0
      %p125 = por %p123, %p124
      %p126 = scmp.ne.s32.totalorder %s112, %s113
      %p127 = scmp.eq.s32.totalorder %s21, 1
      %p128 = por %p126, %p127
      %p130 = scmp.ne.s32.totalorder %s113, %s129
      %p131 = scmp.eq.s32.totalorder %s21, 0
      %p132 = por %p130, %p131
      %s133 = ssub.s32 %s22, %s48
      %s134 = ssub.s32 %s24, %s40
      %s135 = sor.u32 %s133, %s134
      %s136 = ssub.s32 %s23, %s44
      %s137 = sor.u32 %s135, %s136
      %p138 = scmp.eq.s32.totalorder %s137, 0
      %s140 = sadd.s32 %s139, 1
      %s141 = scalar_select %p138, %s139, %s140
      %p144 = pneg %p138
      %p145 = scmp.eq.s32.totalorder %s15, 1
      %p146 = por %p144, %p145
      %p147 = scmp.ne.s32.totalorder %s139, %s142
      %p148 = scmp.eq.s32.totalorder %s15, 0
      %p149 = por %p147, %p148
      %p150 = scmp.ne.s32.totalorder %s139, %s142
      %p151 = scmp.eq.s32.totalorder %s20, 1
      %p152 = por %p150, %p151
      %p153 = scmp.ne.s32.totalorder %s142, %s143
      %p154 = scmp.eq.s32.totalorder %s20, 0
      %p155 = por %p153, %p154
      %p156 = scmp.ne.s32.totalorder %s142, %s143
      %p157 = scmp.eq.s32.totalorder %s21, 1
      %p158 = por %p156, %p157
      %p160 = scmp.ne.s32.totalorder %s143, %s159
      %p161 = scmp.eq.s32.totalorder %s21, 0
      %p162 = por %p160, %p161
      %p163 = scmp.le.s32.totalorder 1, %s15
      %p164 = scmp.lt.s32.totalorder %s15, 3
      %p165 = pnand %p163, %p164
      %p166 = pneg %p165
      // Predicated region
      $region9: #{tpu_custom_call.1} parent=5 // pred_check
        _
      $region10: #{tpu_custom_call.1} parent=5 // pred_check_branch
        %168 = sbr.rel (%p165) target = $region12
      $region11: #{tpu_custom_call.1} parent=5 // pred_region
        %s169 = ssub.s32 %s15, 1
        // Predicated region
        $region13: #{tpu_custom_call.1} parent=11 // pred_check
          %p170 = pneg %p99
        $region14: #{tpu_custom_call.1} parent=11 // pred_check_branch
          %172 = sbr.rel (%p170) target = $region16
        $region15: #{tpu_custom_call.1} parent=11 // pred_region
          %p173 = scmp.lt.s32.totalorder %s28, 0
          %s174 = scalar_select %p173, %s28, 0
          %p175 = scmp.lt.s32.totalorder %s29, 0
          %s176 = scalar_select %p175, %s29, 0
          %s177 = sadd.s32 %s176, %s174
          %s178 = smul.addr %s177, 4
          %s179 = scalar_lea.vmem %s1, %s178
        $region16: #{tpu_custom_call.1} parent=11 // pred_fallthru
          _
        // Predicated region
        $region17: #{tpu_custom_call.1} parent=11 // pred_check
          %p180 = pneg %p125
        $region18: #{tpu_custom_call.1} parent=11 // pred_check_branch
          %182 = sbr.rel (%p180) target = $region20
        $region19: #{tpu_custom_call.1} parent=11 // pred_region
          %p183 = scmp.lt.s32.totalorder %s28, 0
          %s184 = scalar_select %p183, %s28, 0
          %s185 = smul.addr %s184, 4
          %s186 = scalar_lea.vmem %s2, %s185
        $region20: #{tpu_custom_call.1} parent=11 // pred_fallthru
          _
      $region12: #{tpu_custom_call.1} parent=5 // pred_fallthru
        _
      %p187 = scmp.lt.s32.totalorder %s15, 2
      // Predicated region
      $region21: #{tpu_custom_call.1} parent=5 // pred_check
        %p188 = pneg %p187
      $region22: #{tpu_custom_call.1} parent=5 // pred_check_branch
        %190 = sbr.rel (%p188) target = $region24
      $region23: #{tpu_custom_call.1} parent=5 // pred_region
        // Predicated region
        $region25: #{tpu_custom_call.1} parent=23 // pred_check
          %p191 = pneg %p65
        $region26: #{tpu_custom_call.1} parent=23 // pred_check_branch
          %193 = sbr.rel (%p191) target = $region28
        $region27: #{tpu_custom_call.1} parent=23 // pred_region
          %s194 = sand.u32 %s55, 1
          %s195 = scalar_lea.sflag [#allocation4], %s194
          %s196 = sand.u32 %s55, 1
          %s197 = smul.addr %s196, 8
          %s198 = scalar_lea.vmem [#allocation3], %s197
          %s199 = smul.u32 2, %s23
          %s201 = ssub.s32 128, 128
          %202 = vsyncadd %s195, %s201
          %s203 = smul.addr %s25, 2
          %s204 = sadd.s32 %s199, %s203
          %s205 = smul.addr %s22, 2
          %s206 = sadd.s32 %s204, %s205
          %s207 = smul.addr %s206, 64
          %s208 = scalar_lea.hbm %s0, %s207
          %s210 = sshll.u32 %s198, 4
          %s211 = int_to_ptr.vmem [resolvable:$true] %s210
          %213 = dma.hbm_to_vmem [thread:$0]  %s208, 128, %s211, %s195
        $region28: #{tpu_custom_call.1} parent=23 // pred_fallthru
          _
      $region24: #{tpu_custom_call.1} parent=5 // pred_fallthru
        _
      %p214 = scmp.le.s32.totalorder 1, %s15
      %p215 = scmp.lt.s32.totalorder %s15, 3
      %p216 = pnand %p214, %p215
      %p217 = pneg %p216
      // Predicated region
      $region29: #{tpu_custom_call.1} parent=5 // pred_check
        _
      $region30: #{tpu_custom_call.1} parent=5 // pred_check_branch
        %219 = sbr.rel (%p216) target = $region32
      $region31: #{tpu_custom_call.1} parent=5 // pred_region
        %s220 = ssub.s32 %s15, 1
        %s221 = sand.u32 %s58, 1
        %s222 = scalar_lea.sflag [#allocation4], %s221
        %s223 = sand.u32 %s58, 1
        %s224 = smul.addr %s223, 8
        %s225 = scalar_lea.vmem [#allocation3], %s224
        // Predicated region
        $region33: #{tpu_custom_call.1} parent=31 // pred_check
          %p226 = pneg %p71
        $region34: #{tpu_custom_call.1} parent=31 // pred_check_branch
          %228 = sbr.rel (%p226) target = $region36
        $region35: #{tpu_custom_call.1} parent=31 // pred_region
          %229 = dma.done %s222, 128
        $region36: #{tpu_custom_call.1} parent=31 // pred_fallthru
          _
        %s230 = sand.u32 %s58, 1
        %s231 = scalar_lea.sflag [#allocation4], %s230
        %s232 = sand.u32 %s58, 1
        %s233 = smul.addr %s232, 8
        %s234 = scalar_lea.vmem [#allocation3], %s233
        %p235 = pneg %p71
        %p236 = pneg %p68
        %p237 = scmp.lt.s32.totalorder %s28, 0
        %s238 = scalar_select %p237, %s28, 0
        %p239 = scmp.lt.s32.totalorder %s29, 0
        %s240 = scalar_select %p239, %s29, 0
        %s241 = sadd.s32 %s240, %s238
        %s242 = smul.addr %s241, 4
        %s243 = scalar_lea.vmem %s1, %s242
        %p244 = pneg %p99
        %p245 = pneg %p96
        %p246 = scmp.lt.s32.totalorder %s28, 0
        %s247 = scalar_select %p246, %s28, 0
        %s248 = smul.addr %s247, 4
        %s249 = scalar_lea.vmem %s2, %s248
        %p250 = pneg %p125
        %p251 = pneg %p122
        %p252 = pneg %p155
        %p253 = pneg %p152
        %s254 = sand.u32 %s142, 1
        %s255 = scalar_lea.sflag [#allocation5], %s254
        %s256 = sand.u32 %s142, 1
        %s257 = smul.addr %s256, 8
        %s258 = scalar_lea.vmem [#allocation6], %s257
        %s259 = smul.u32 2, %s27
        %p260 = scmp.lt.s32.totalorder %s28, 0
        %s261 = scalar_select %p260, %s28, 0
        %p262 = scmp.lt.s32.totalorder %s29, 0
        %s263 = scalar_select %p262, %s29, 0
        %s264 = sadd.s32 %s263, %s261
        %s265 = smul.addr %s264, 4
        %s266 = scalar_lea.vmem %s1, %s265
        %p267 = scmp.lt.s32.totalorder %s28, 0
        %s268 = scalar_select %p267, %s28, 0
        %s269 = smul.addr %s268, 4
        %s270 = scalar_lea.vmem %s2, %s269
        %s271 = smul.u32 2, %s27
        %p272 = scmp.eq.s32.totalorder %s29, 0
        // Predicated region
        $region37: #{tpu_custom_call.1} parent=31 // pred_check
          %p273 = pneg %p272
        $region38: #{tpu_custom_call.1} parent=31 // pred_check_branch
          %275 = sbr.rel (%p273) target = $region40
        $region39: #{tpu_custom_call.1} parent=31 // pred_region
          %276 = vst [vmem:[#allocation2] sm:$0xff] 0.0
        $region40: #{tpu_custom_call.1} parent=31 // pred_fallthru
          _
        %v277 = vld [vmem:[#allocation2] sm:$0xff]
        %v278 = vld [vmem:[%s266] sm:$0xf]
        %v279 = vld [vmem:[%s225] sm:$0xff]
        %v281 = vcombine.high %v279, %v279
        %vm282 = vcmask 31744
        %v284 = vsel %vm282, %v278, 0
        %vm286 = vcmask 1043456
        %v287 = vsel %vm286, %v279, 0
        %v289 = vsel %vm286, %v281, 0
        %291 = vmatprep.subr.mxu0 %v289
        %292 = vmatpush1.msra.mxu0 %v287
        %293 = vmatprep.subr.mxu0 0.0
        %294 = vmatpush1.msra.mxu0 0.0
        %295 = vmatprep.subr.mxu0 0.0
        %296 = vmatpush1.msra.mxu0 0.0
        %297 = vmatprep.subr.mxu0 0.0
        %298 = vmatpush1.msra.mxu0 0.0
        %299 = vmatprep.subr.mxu0 0.0
        %300 = vmatpush1.msra.mxu0 0.0
        %301 = vmatprep.subr.mxu0 0.0
        %302 = vmatpush1.msra.mxu0 0.0
        %303 = vmatprep.subr.mxu0 0.0
        %304 = vmatpush1.msra.mxu0 0.0
        %305 = vmatprep.subr.mxu0 0.0
        %306 = vmatpush1.msra.mxu0 0.0
        %307 = vmatprep.subr.mxu0 0.0
        %308 = vmatpush1.msra.mxu0 0.0
        %309 = vmatprep.subr.mxu0 0.0
        %310 = vmatpush1.msra.mxu0 0.0
        %311 = vmatprep.subr.mxu0 0.0
        %312 = vmatpush1.msra.mxu0 0.0
        %313 = vmatprep.subr.mxu0 0.0
        %314 = vmatpush1.msra.mxu0 0.0
        %315 = vmatprep.subr.mxu0 0.0
        %316 = vmatpush1.msra.mxu0 0.0
        %317 = vmatprep.subr.mxu0 0.0
        %318 = vmatpush1.msra.mxu0 0.0
        %319 = vmatprep.subr.mxu0 0.0
        %320 = vmatpush1.msra.mxu0 0.0
        %321 = vmatprep.subr.mxu0 0.0
        %322 = vmatpush1.msra.mxu0 0.0
        %323 = vmatprep.subr.mxu0 0.0
        %324 = vmatpush1.msra.mxu0 0.0
        %325 = vmatprep.subr.mxu0 0.0
        %326 = vmatpush1.msra.mxu0 0.0
        %327 = vmatprep.subr.mxu0 0.0
        %328 = vmatpush1.msra.mxu0 0.0
        %329 = vmatprep.subr.mxu0 0.0
        %330 = vmatpush1.msra.mxu0 0.0
        %331 = vmatprep.subr.mxu0 0.0
        %332 = vmatpush1.msra.mxu0 0.0
        %333 = vmatprep.subr.mxu0 0.0
        %334 = vmatpush1.msra.mxu0 0.0
        %335 = vmatprep.subr.mxu0 0.0
        %336 = vmatpush1.msra.mxu0 0.0
        %337 = vmatprep.subr.mxu0 0.0
        %338 = vmatpush1.msra.mxu0 0.0
        %339 = vmatprep.subr.mxu0 0.0
        %340 = vmatpush1.msra.mxu0 0.0
        %341 = vmatprep.subr.mxu0 0.0
        %342 = vmatpush1.msra.mxu0 0.0
        %343 = vmatprep.subr.mxu0 0.0
        %344 = vmatpush1.msra.mxu0 0.0
        %345 = vmatprep.subr.mxu0 0.0
        %346 = vmatpush1.msra.mxu0 0.0
        %347 = vmatprep.subr.mxu0 0.0
        %348 = vmatpush1.msra.mxu0 0.0
        %349 = vmatprep.subr.mxu0 0.0
        %350 = vmatpush1.msra.mxu0 0.0
        %351 = vmatprep.subr.mxu0 0.0
        %352 = vmatpush1.msra.mxu0 0.0
        %353 = vmatprep.subr.mxu0 0.0
        %354 = vmatpush1.msra.mxu0 0.0
        %355 = vmatprep.mubr.f32.mxu0 0.0
        %356 = vmatmul.mubr.f32.gmra.mrb[0].mxu0 %v284
        %v357 = vpop.f32.mrb[0].mxu0
        %v358 = vadd.f32 0.0, %v357
        %v359 = vpop.f32.mrb[0].mxu0
        %v360 = vadd.f32 0.0, %v359
        %361 = vdwg.mxu0
        %v364 = vcombine.low %v358, %v360
        %v366 = vadd.f32 %v277, %v364
        %367 = vst [vmem:[#allocation2] sm:$0xff] %v366
        // Predicated region
        $region41: #{tpu_custom_call.1} parent=31 // pred_check
          %p368 = pneg %p272
        $region42: #{tpu_custom_call.1} parent=31 // pred_check_branch
          %370 = sbr.rel (%p368) target = $region44
        $region43: #{tpu_custom_call.1} parent=31 // pred_region
          %v371 = vld [vmem:[#allocation2] sm:$0xff]
          %v372 = vld [vmem:[%s270] sm:$0xf]
          %374 = vset.pattern.permute.xlu0 0
          %375 = vperm.xlu0 %374, %v372
          %v376 = vpop.permute.xlu0 %375
          %v378 = vunpack.c.l.s4 839922192
          %v379 = vunpack.c.0.s8 %v378
          %v380 = vlaneseq
          %v381 = vshrl.u32 %v380, 7
          %v382 = vsub.s32 %v379, %v381
          %v383 = vrot.slane %v376, %v382
          %v385 = vadd.f32 %v371, %v383
          %386 = vst [vmem:[%s258] sm:$0xff] %v385
        $region44: #{tpu_custom_call.1} parent=31 // pred_fallthru
          _
        %s387 = sand.u32 %s142, 1
        %s388 = scalar_lea.sflag [#allocation5], %s387
        %s389 = sand.u32 %s142, 1
        %s390 = smul.addr %s389, 8
        %s391 = scalar_lea.vmem [#allocation6], %s390
        // Predicated region
        $region45: #{tpu_custom_call.1} parent=31 // pred_check
          %p392 = pneg %p152
        $region46: #{tpu_custom_call.1} parent=31 // pred_check_branch
          %394 = sbr.rel (%p392) target = $region48
        $region47: #{tpu_custom_call.1} parent=31 // pred_region
          %s395 = smul.u32 2, %s27
          %s397 = ssub.s32 128, 128
          %398 = vsyncadd %s388, %s397
          %s399 = smul.addr %s28, 2
          %s400 = sadd.s32 %s395, %s399
          %s401 = smul.addr %s26, 2
          %s402 = sadd.s32 %s400, %s401
          %s403 = smul.addr %s402, 64
          %s404 = scalar_lea.hbm %s3, %s403
          %s406 = sshll.u32 %s391, 4
          %s407 = int_to_ptr.vmem [resolvable:$true] %s406
          %409 = dma.vmem_to_hbm [thread:$0]  %s407, 128, %s404, %s388
        $region48: #{tpu_custom_call.1} parent=31 // pred_fallthru
          _
      $region32: #{tpu_custom_call.1} parent=5 // pred_fallthru
        _
      %p410 = scmp.le.s32.totalorder 2, %s15
      // Predicated region
      $region49: #{tpu_custom_call.1} parent=5 // pred_check
        %p411 = pneg %p410
      $region50: #{tpu_custom_call.1} parent=5 // pred_check_branch
        %413 = sbr.rel (%p411) target = $region52
      $region51: #{tpu_custom_call.1} parent=5 // pred_region
        %s414 = ssub.s32 %s15, 2
        // Predicated region
        $region53: #{tpu_custom_call.1} parent=51 // pred_check
          %p415 = pneg %p158
        $region54: #{tpu_custom_call.1} parent=51 // pred_check_branch
          %417 = sbr.rel (%p415) target = $region56
        $region55: #{tpu_custom_call.1} parent=51 // pred_region
          %s418 = sand.u32 %s143, 1
          %s419 = scalar_lea.sflag [#allocation5], %s418
          %s420 = sand.u32 %s143, 1
          %s421 = smul.addr %s420, 8
          %s422 = scalar_lea.vmem [#allocation6], %s421
          %423 = dma.done %s419, 128
        $region56: #{tpu_custom_call.1} parent=51 // pred_fallthru
          _
      $region52: #{tpu_custom_call.1} parent=5 // pred_fallthru
        _
    $region6: #{tpu_custom_call.1} parent=1 // loop_footer
      %s19 = sadd.s32 1, %s15
    $region7: #{tpu_custom_call.1} parent=1 // loop_footer_branch
      %14 = sbr.rel target = $region3
    $region8: #{tpu_custom_call.1} parent=1 // loop_exit
      _
    %424 = vsyncpa [#allocation4], 1
    %s425 = scalar_lea.sflag [#allocation4], 1
    %426 = vsyncpa %s425, 1
    %427 = vsyncpa [#allocation5], 1
    %s428 = scalar_lea.sflag [#allocation5], 1
    %429 = vsyncpa %s428, 1

</llo_original>
